<compile_context>
chip_gen: v7x
topology: tpu7x:2x2x1
jax: 0.10.0
libtpu: 0.0.40
codegen_flags: <defaults>
</compile_context>

<pallas_src>
import math

import jax
import jax.numpy as jnp
from jax.experimental import pallas as pl
from jax.experimental.pallas import tpu as pltpu


_MAX_DMA_CHUNKS = 8                      # concurrent HBM->HBM DMA chunks
_MIN_DMA_CHUNK_BYTES = 1 * 1024 * 1024   # don't bother splitting tiny copies
_MIN_VMEM_BLOCK_BYTES = 2 * 1024 * 1024  # floor for the tiled-pipeline blocks


# --------------------------------------------------------------------------
# Generation-conditional tuning (v5e/v6e: 128 MiB VMEM; v7x: 64 MiB VMEM).
# --------------------------------------------------------------------------
def _generation_params():
    """Returns (target_block_bytes, vmem_limit_bytes) for the tiled path."""
    vmem_cap = 64 * 1024 * 1024
    try:
        info = pltpu.get_tpu_info()
        vmem_cap = int(getattr(info, "vmem_capacity_bytes", vmem_cap))
    except Exception:
        pass
    if vmem_cap >= 128 * 1024 * 1024:
        # v5e / v6e: plenty of VMEM -> bigger blocks, fewer pipeline steps.
        return 8 * 1024 * 1024, 64 * 1024 * 1024
    # v7x (64 MiB physical VMEM): larger-than-default blocks but conservative
    # scoped limit; keep 4 * block <= 0.75 * limit.
    return 6 * 1024 * 1024, 40 * 1024 * 1024


def _sublane_multiple(dtype) -> int:
    # (8,128) rule scales with packing: f32 -> 8, bf16 -> 16, int8/fp8 -> 32.
    itemsize = jnp.dtype(dtype).itemsize
    return max(8, 8 * (4 // max(1, itemsize)))


# --------------------------------------------------------------------------
# Path 1 (default): multi-chunk HBM -> HBM DMA.  No VMEM staging, no
# vector load/store slots, no (8,128) constraint, works for any shape.
# --------------------------------------------------------------------------
def _make_multichunk_dma_kernel(row_splits):
    """row_splits: static tuple of (start_row, num_rows)."""

    def kernel(src_hbm, dst_hbm, sems):
        copies = []
        for idx, (start, size) in enumerate(row_splits):
            cp = pltpu.make_async_copy(
                src_hbm.at[pl.ds(start, size), :],
                dst_hbm.at[pl.ds(start, size), :],
                sems.at[idx],
            )
            cp.start()
            copies.append(cp)
        # All DMAs are in flight before the first wait -> concurrent queues.
        for cp in copies:
            cp.wait()

    return kernel


def _dma_copy(x2d: jax.Array) -> jax.Array:
    rows, _hidden = x2d.shape
    row_bytes = _hidden * jnp.dtype(x2d.dtype).itemsize
    total_bytes = rows * row_bytes

    n_chunks = min(_MAX_DMA_CHUNKS, rows,
                   max(1, total_bytes // _MIN_DMA_CHUNK_BYTES))
    n_chunks = max(1, int(n_chunks))

    base, rem = divmod(rows, n_chunks)
    splits, start = [], 0
    for i in range(n_chunks):
        size = base + (1 if i < rem else 0)
        if size > 0:
            splits.append((start, size))
            start += size
    splits = tuple(splits)

    return pl.pallas_call(
        _make_multichunk_dma_kernel(splits),
        out_shape=jax.ShapeDtypeStruct(x2d.shape, x2d.dtype),
        in_specs=[pl.BlockSpec(memory_space=pl.ANY)],
        out_specs=pl.BlockSpec(memory_space=pl.ANY),
        scratch_shapes=[pltpu.SemaphoreType.DMA((len(splits),))],
    )(x2d)


# --------------------------------------------------------------------------
# Path 2 (opt-in): row-tiled HBM -> VMEM -> HBM pipeline.  Kept only as a
# future fusion point (e.g. if state init grows elementwise compute).
# --------------------------------------------------------------------------
def _vmem_copy_kernel(enc_ref, out_ref):
    out_ref[...] = enc_ref[...]


def _choose_tile(rows, hidden, dtype):
    """Pick a row-tile for the VMEM pipeline, or None -> use DMA path."""
    itemsize = jnp.dtype(dtype).itemsize
    sub = _sublane_multiple(dtype)
    if hidden % 128 != 0 or rows % sub != 0:
        return None, None
    target_block_bytes, vmem_limit = _generation_params()
    row_bytes = hidden * itemsize

    tile = (target_block_bytes // max(1, row_bytes)) // sub * sub
    tile = max(sub, min(tile, (rows // sub) * sub))

    # Prefer >= 4 pipeline steps (overlaps block-i writeback with block-(i+1)
    # read; also shards across v7x's 2 TCs) as long as blocks stay >= 2 MiB.
    desired = (rows // 4) // sub * sub
    if sub <= desired < tile and desired * row_bytes >= _MIN_VMEM_BLOCK_BYTES:
        tile = desired

    # Fits-VMEM check on the tile actually chosen, with ~25% headroom for
    # Mosaic internal scratch (in + out, double-buffered).
    if 4 * tile * row_bytes > (3 * vmem_limit) // 4:
        return None, None
    return tile, vmem_limit


def _tiled_vmem_copy(x2d: jax.Array, tile: int, vmem_limit: int) -> jax.Array:
    rows, hidden = x2d.shape
    return pl.pallas_call(
        _vmem_copy_kernel,
        out_shape=jax.ShapeDtypeStruct((rows, hidden), x2d.dtype),
        grid=(pl.cdiv(rows, tile),),  # ragged last block handled by Pallas
        in_specs=[pl.BlockSpec((tile, hidden), lambda i: (i, 0))],
        out_specs=pl.BlockSpec((tile, hidden), lambda i: (i, 0)),
        compiler_params=pltpu.CompilerParams(
            dimension_semantics=("parallel",),
            vmem_limit_bytes=vmem_limit,
        ),
    )(x2d)


# --------------------------------------------------------------------------
# Wrapper (BaseState.forward semantics: identity pass-through).
# --------------------------------------------------------------------------
def _as_2d(x: jax.Array):
    if x.ndim == 0:
        return x.reshape(1, 1)
    if x.ndim == 1:
        return x.reshape(1, x.shape[0])
    hidden = x.shape[-1]
    rows = int(math.prod(x.shape[:-1]))
    return x.reshape(rows, hidden)


def _pallas_identity_copy(x: jax.Array, use_vmem_pipeline: bool) -> jax.Array:
    if x.size == 0:
        return x  # nothing to copy
    x2d = _as_2d(x)
    if use_vmem_pipeline:
        tile, vmem_limit = _choose_tile(x2d.shape[0], x2d.shape[1], x2d.dtype)
        if tile is not None:
            return _tiled_vmem_copy(x2d, tile, vmem_limit).reshape(x.shape)
    return _dma_copy(x2d).reshape(x.shape)


def base_state_forward(enc_output: jax.Array, *args,
                       materialize: bool = False,
                       use_vmem_pipeline: bool = False) -> jax.Array:
    """Pallas-backed BaseState.forward: identity (state := enc_output).

    Default is the zero-copy identity (returns the SAME buffer; callers that
    need a fresh, non-aliased buffer must pass materialize=True).
    materialize=True produces a fresh buffer via a multi-chunk HBM->HBM DMA;
    use_vmem_pipeline=True additionally opts into the tiled VMEM pipeline
    (kept as a fusion point for future elementwise state-init compute).
    """
    del args  # BaseState ignores extra positional args
    if not materialize:
        return enc_output
    return _pallas_identity_copy(enc_output, use_vmem_pipeline)


if __name__ == "__main__":
    key = jax.random.PRNGKey(0)
    k1, k2 = jax.random.split(key)

    # Small shape implied by the module: [batch=2, seq=8, hidden=32].
    enc_small = jax.random.normal(k1, (2, 8, 32), dtype=jnp.float32)

    # Default path: zero-copy identity (no kernel, no HBM traffic).
    state_fast = base_state_forward(enc_small)
    jax.block_until_ready(state_fast)
    assert state_fast.shape == enc_small.shape
    assert state_fast.dtype == enc_small.dtype
    assert bool(jnp.allclose(state_fast, enc_small))

    # Forced materialization (default): multi-chunk HBM->HBM DMA path.
    state_dma = base_state_forward(enc_small, materialize=True)
    jax.block_until_ready(state_dma)
    assert state_dma.shape == enc_small.shape
    assert state_dma.dtype == enc_small.dtype
    assert bool(jnp.allclose(state_dma, enc_small))

    # Opt-in VMEM-tiled pipeline on a lane-dense shape.
    enc_big = jax.random.normal(k2, (2, 64, 256), dtype=jnp.float32)
    state_tiled = base_state_forward(enc_big, materialize=True,
                                     use_vmem_pipeline=True)
    jax.block_until_ready(state_tiled)
    assert state_tiled.shape == enc_big.shape
    assert state_tiled.dtype == enc_big.dtype
    assert bool(jnp.allclose(state_tiled, enc_big))

    print("KERNEL_OK")
</pallas_src>

<mosaic_0001>
module attributes {stable_mosaic.version = 11 : i64} {
  func.func @kernel(%arg0: memref<16x32xf32, #tpu.memory_space<any>>, %arg1: memref<16x32xf32, #tpu.memory_space<any>>, %arg2: memref<1x!tpu.dma_semaphore, #tpu.memory_space<semaphore_mem>>) attributes {dimension_semantics = [], scalar_prefetch = 0 : i64, scratch_operands = 1 : i64, tpu.core_type = #tpu.core_type<tc>} {
    %c0_i32 = arith.constant 0 : i32
    %c0_i32_0 = arith.constant 0 : i32
    %c0_i32_1 = arith.constant 0 : i32
    %0 = tpu.memref_slice %arg0[%c0_i32_0, %c0_i32_1] : memref<16x32xf32, #tpu.memory_space<any>> -> memref<16x32xf32, #tpu.memory_space<any>>
    %c0_i32_2 = arith.constant 0 : i32
    %c0_i32_3 = arith.constant 0 : i32
    %1 = tpu.memref_slice %arg1[%c0_i32_2, %c0_i32_3] : memref<16x32xf32, #tpu.memory_space<any>> -> memref<16x32xf32, #tpu.memory_space<any>>
    %2 = tpu.memref_slice %arg2[%c0_i32] : memref<1x!tpu.dma_semaphore, #tpu.memory_space<semaphore_mem>> -> memref<1x!tpu.dma_semaphore, #tpu.memory_space<semaphore_mem>>
    %3 = tpu.memref_squeeze %2 : memref<1x!tpu.dma_semaphore, #tpu.memory_space<semaphore_mem>> -> memref<!tpu.dma_semaphore, #tpu.memory_space<semaphore_mem>>
    tpu.enqueue_dma source(%0 : memref<16x32xf32, #tpu.memory_space<any>>) target(%1 : memref<16x32xf32, #tpu.memory_space<any>>) target_semaphore(%3 : memref<!tpu.dma_semaphore, #tpu.memory_space<semaphore_mem>>)
    %c0_i32_4 = arith.constant 0 : i32
    %c0_i32_5 = arith.constant 0 : i32
    %c0_i32_6 = arith.constant 0 : i32
    %4 = tpu.memref_slice %arg0[%c0_i32_5, %c0_i32_6] : memref<16x32xf32, #tpu.memory_space<any>> -> memref<16x32xf32, #tpu.memory_space<any>>
    %c0_i32_7 = arith.constant 0 : i32
    %c0_i32_8 = arith.constant 0 : i32
    %5 = tpu.memref_slice %arg1[%c0_i32_7, %c0_i32_8] : memref<16x32xf32, #tpu.memory_space<any>> -> memref<16x32xf32, #tpu.memory_space<any>>
    %6 = tpu.memref_slice %arg2[%c0_i32_4] : memref<1x!tpu.dma_semaphore, #tpu.memory_space<semaphore_mem>> -> memref<1x!tpu.dma_semaphore, #tpu.memory_space<semaphore_mem>>
    %7 = tpu.memref_squeeze %6 : memref<1x!tpu.dma_semaphore, #tpu.memory_space<semaphore_mem>> -> memref<!tpu.dma_semaphore, #tpu.memory_space<semaphore_mem>>
    tpu.wait_dma2 semaphore(%7 : memref<!tpu.dma_semaphore, #tpu.memory_space<semaphore_mem>>) src(%4 : memref<16x32xf32, #tpu.memory_space<any>>) dst(%5 : memref<16x32xf32, #tpu.memory_space<any>>)
    return
  }
}

</mosaic_0001>

<llo_original>
// kernel: tpu_custom_call.1
$region0: #{tpu_custom_call.1}
  #allocation0 [shape = 'u32[]', space=smem, size = 0x4, offset = 0x4, fixed_abs, tag = 'smem constant byte address 0x4 - core index']
  #allocation1 [shape = 'u32[144,128]{1,0:T(1,128)}', space=vmem, size = 0x12000, scoped, tag = 'internal scratch']
  #allocation2 [shape = 's32[1]{0}', space=sflag, size = 0x4, scoped, tag = 'scratch operand']
  #allocation3 [shape = 's32[]', space=sflag, size = 0x4, offset = 0, fixed_abs, tag = 'sflag constant byte address 0x0 - dummy sync flag']
  #allocation4 [shape = 'u32[0]{0}', space=smem, size = 0, offset = 0, fixed_abs, tag = 'smem constant byte address 0x0 - null']
  %s0 = inlined_call_operand.hbm [shape: f32[16,32], index: 0, kind: input, shape index: {}]
  %s1 = inlined_call_operand.hbm [shape: f32[16,32], index: 1, kind: output, shape index: {}]
  %s2 = sld [smem:[#allocation0]]
  $region2: #{tpu_custom_call.1} parent=0
    _
  %s4 = ssub.s32 1, %s2
  %s5 = scalar_select 0, %s4, %s2
  %s7 = sshll.u32 1, 14
  %s8 = sxor.u32 4294967295, %s7
  %s11 = sshll.u32 3, 24
  %s12 = sxor.u32 4294967295, %s11
  %s13 = sand.u32 0, %s12
  %s15 = sor.u32 %s13, 0
  %18 = dma.general %s0, 256, %s1, [#allocation2], [#allocation3], [#allocation4], %s15, 0
  %s19 = smul.u32 16, 1
  %s20 = sshll.u32 %s19, 4
  %21 = dma.done [#allocation2], %s20
  %22 = vsyncmov [#allocation2]
  %s23 = vpop.sfrf %22
  %p24 = scmp.eq.s32.totalorder %s23, 0
  %p25 = pneg %p24
  %27 = shalt.err (%p25)

</llo_original>
